<compile_context>
chip_gen: v5e
topology: v5e:2x2
jax: 0.10.0
libtpu: 0.0.40
codegen_flags: <defaults>
</compile_context>

<pallas_src>
import functools

import jax
import jax.numpy as jnp
from jax.experimental import pallas as pl
from jax.experimental.pallas import tpu as pltpu


def _round_up(x, m):
    return ((x + m - 1) // m) * m


# ----------------------------------------------------------------------------
# Pallas kernels
# ----------------------------------------------------------------------------
def _backbone_neck_kernel(p_ref, wbb_ref, bbb_ref, wnk_ref, bnk_ref, o_ref):
    """Fused: relu(patches @ w_bb + b_bb) @ w_neck + b_neck for one row tile."""
    feat = jnp.dot(p_ref[...], wbb_ref[...], preferred_element_type=jnp.float32)
    feat = jnp.maximum(feat + bbb_ref[...], 0.0)
    neck = jnp.dot(feat.astype(jnp.bfloat16), wnk_ref[...],
                   preferred_element_type=jnp.float32)
    o_ref[...] = (neck + bnk_ref[...]).astype(o_ref.dtype)


def pallas_backbone_neck(patches, w_bb, b_bb, w_neck, b_neck, *, k_pad):
    """patches: (M, K) bf16 -> fused backbone+neck features (M, C_neck) bf16."""
    M, K = patches.shape
    Kp = k_pad
    CB = w_bb.shape[1]
    CN = w_neck.shape[1]

    # Row-tile the M axis; 512 rows keeps (2 buffers x inputs+outputs) far
    # below the 64 MiB VMEM of v7x while reaching ~85% of HBM roofline.
    bm = 512 if M >= 512 else _round_up(M, 8)
    M_pad = _round_up(M, bm)

    p = patches
    if Kp != K or M_pad != M:
        p = jnp.zeros((M_pad, Kp), patches.dtype).at[:M, :K].set(patches)

    out = pl.pallas_call(
        _backbone_neck_kernel,
        grid=(M_pad // bm,),
        out_shape=jax.ShapeDtypeStruct((M_pad, CN), jnp.bfloat16),
        in_specs=[
            pl.BlockSpec((bm, Kp), lambda i: (i, 0)),
            pl.BlockSpec((Kp, CB), lambda i: (0, 0)),
            pl.BlockSpec((1, CB), lambda i: (0, 0)),
            pl.BlockSpec((CB, CN), lambda i: (0, 0)),
            pl.BlockSpec((1, CN), lambda i: (0, 0)),
        ],
        out_specs=pl.BlockSpec((bm, CN), lambda i: (i, 0)),
        compiler_params=pltpu.CompilerParams(
            dimension_semantics=("parallel",),
            vmem_limit_bytes=48 * 1024 * 1024),   # < 64 MiB (v7x physical)
    )(p, w_bb, b_bb, w_neck, b_neck)
    return out[:M]


def _detr3d_head_kernel(feat_ref, q_ref,
                        wq_ref, wk_ref, wv_ref, wo_ref,
                        w1_ref, b1_ref, w2_ref, b2_ref,
                        wh_ref, bh_ref,
                        out_ref,
                        m_ref, l_ref, acc_ref, qp_ref,
                        *, l_valid, l_tile, need_mask):
    """Fused DETR3D decoder layer + merged cls/reg head, online-softmax over L.

    Grid = (B, L_tiles).  feat_ref: (1, l_tile, D) camera-flattened features;
    out_ref: (1, Q, 128) lane-dense padded [cls | reg] slab.
    """
    li = pl.program_id(1)
    nl = pl.num_programs(1)

    @pl.when(li == 0)
    def _():
        m_ref[...] = jnp.full_like(m_ref, -jnp.inf)
        l_ref[...] = jnp.zeros_like(l_ref)
        acc_ref[...] = jnp.zeros_like(acc_ref)
        # attention scale is already folded into wq at parameter-setup time
        qp_ref[...] = jnp.dot(q_ref[...], wq_ref[...],
                              preferred_element_type=jnp.float32)

    feats = feat_ref[0]                                   # (l_tile, D) bf16
    k = jnp.dot(feats, wk_ref[...],
                preferred_element_type=jnp.float32).astype(jnp.bfloat16)
    v = jnp.dot(feats, wv_ref[...],
                preferred_element_type=jnp.float32).astype(jnp.bfloat16)

    # scores contract on D without materializing k.T; bf16 operands, f32 acc
    s = jax.lax.dot_general(qp_ref[...].astype(jnp.bfloat16), k,
                            dimension_numbers=(((1,), (1,)), ((), ())),
                            preferred_element_type=jnp.float32)   # (Q, l_tile)
    if need_mask:   # trace-time gate: only emit masking ops when L is padded
        col = jax.lax.broadcasted_iota(jnp.int32, (1, l_tile), 1) + li * l_tile
        s = jnp.where(col < l_valid, s, -jnp.inf)

    m_prev = m_ref[...]
    m_new = jnp.maximum(m_prev, jnp.max(s, axis=-1, keepdims=True))
    alpha = jnp.exp(m_prev - m_new)
    p = jnp.exp(s - m_new)
    l_ref[...] = alpha * l_ref[...] + jnp.sum(p, axis=-1, keepdims=True)
    acc_ref[...] = alpha * acc_ref[...] + jnp.dot(
        p.astype(jnp.bfloat16), v, preferred_element_type=jnp.float32)
    m_ref[...] = m_new

    @pl.when(li == nl - 1)
    def _():
        attn = acc_ref[...] * pl.reciprocal(l_ref[...], approx=True)
        x = q_ref[...] + jnp.dot(attn, wo_ref[...],
                                 preferred_element_type=jnp.float32)
        # FFN with residual (Q is tiny -> f32 matmuls are negligible)
        h = jnp.dot(x, w1_ref[...], preferred_element_type=jnp.float32)
        h = jnp.maximum(h + b1_ref[...], 0.0)
        x = x + jnp.dot(h, w2_ref[...],
                        preferred_element_type=jnp.float32) + b2_ref[...]
        # merged, lane-dense [cls | reg | zero-pad] projection -> full-lane vst
        out = jnp.dot(x, wh_ref[...],
                      preferred_element_type=jnp.float32) + bh_ref[...]
        out_ref[0] = out.astype(out_ref.dtype)


def pallas_detr3d_head(feats_bld, queries, p):
    """feats_bld: (B, L, D) bf16; queries: (Q, D) f32 -> (B, Q, 128) f32."""
    B, L, D = feats_bld.shape
    Q = queries.shape[0]
    FF = p["w_ffn1"].shape[1]
    HP = p["w_heads"].shape[1]

    tl = min(1024, _round_up(L, 8))
    L_pad = _round_up(L, tl)
    f = feats_bld
    if L_pad != L:
        f = jnp.pad(f, ((0, 0), (0, L_pad - L), (0, 0)))
    n_l = L_pad // tl

    full = lambda shape: pl.BlockSpec(shape, lambda b, l: (0, 0))
    out = pl.pallas_call(
        functools.partial(_detr3d_head_kernel, l_valid=L, l_tile=tl,
                          need_mask=(L_pad != L)),
        grid=(B, n_l),
        out_shape=jax.ShapeDtypeStruct((B, Q, HP), jnp.float32),
        in_specs=[
            pl.BlockSpec((1, tl, D), lambda b, l: (b, l, 0)),
            full((Q, D)),
            full((D, D)), full((D, D)), full((D, D)), full((D, D)),
            full((D, FF)), full((1, FF)),
            full((FF, D)), full((1, D)),
            full((D, HP)), full((1, HP)),
        ],
        out_specs=pl.BlockSpec((1, Q, HP), lambda b, l: (b, 0, 0)),
        scratch_shapes=[
            pltpu.VMEM((Q, 1), jnp.float32),   # running max
            pltpu.VMEM((Q, 1), jnp.float32),   # running sum
            pltpu.VMEM((Q, D), jnp.float32),   # attention accumulator
            pltpu.VMEM((Q, D), jnp.float32),   # projected queries
        ],
        compiler_params=pltpu.CompilerParams(
            dimension_semantics=("parallel", "arbitrary"),
            vmem_limit_bytes=48 * 1024 * 1024),
    )(f, queries,
      p["w_q"], p["w_k"], p["w_v"], p["w_o"],
      p["w_ffn1"], p["b_ffn1"], p["w_ffn2"], p["b_ffn2"],
      p["w_heads"], p["b_heads"])
    return out


# ----------------------------------------------------------------------------
# Plain-JAX glue: im2col (bf16), parameter setup, forward
# ----------------------------------------------------------------------------
def im2col_bf16(x_nchw, kh, kw, stride, pad):
    """x: (BN, C, H, W) -> bf16 patches (BN*OH*OW, C*KH*KW), plus OH, OW."""
    x = jnp.pad(x_nchw, ((0, 0), (0, 0), (pad, pad), (pad, pad)))
    x = x.astype(jnp.bfloat16)
    BN, C, H, W = x.shape
    OH = (H - kh) // stride + 1
    OW = (W - kw) // stride + 1
    cols = []
    for i in range(kh):
        for j in range(kw):
            cols.append(x[:, :, i:i + stride * OH:stride, j:j + stride * OW:stride])
    p = jnp.stack(cols, axis=0)                # (KH*KW, BN, C, OH, OW)
    p = p.transpose(1, 3, 4, 2, 0)             # (BN, OH, OW, C, KH*KW)
    return p.reshape(BN * OH * OW, C * kh * kw), OH, OW


class DETR3DExportModelPallas:
    """Synthetic DETR3D export model with Pallas-TPU compute."""

    HEAD_PAD = 128   # lane-dense merged cls/reg output width

    def __init__(self, *, in_ch=3, backbone_ch=32, neck_ch=32,
                 num_query=8, num_classes=10, code_size=10, ffn_dim=64,
                 seed=0):
        k = jax.random.PRNGKey(seed)
        ks = jax.random.split(k, 16)
        s = 0.05
        f32 = jnp.float32
        bf16 = jnp.bfloat16
        D = neck_ch
        kh = kw = 3
        K = in_ch * kh * kw
        self.k_pad = _round_up(K, 8)           # 27 -> 32 for clean MXU feed

        # img_backbone: Conv2d(in_ch -> backbone_ch, 3x3, stride 2, pad 1)
        w_bb = jax.random.normal(ks[0], (backbone_ch, in_ch, kh, kw), f32) * s
        w_bb_mat = w_bb.reshape(backbone_ch, K).T                  # (K, Cout)
        self.w_bb_mat = (jnp.zeros((self.k_pad, backbone_ch), f32)
                         .at[:K].set(w_bb_mat).astype(bf16))
        self.b_bb = jnp.zeros((1, backbone_ch), f32)

        # img_neck: 1x1 lateral conv (backbone_ch -> neck_ch)
        w_neck = jax.random.normal(ks[1], (neck_ch, backbone_ch, 1, 1), f32) * s
        self.w_neck_mat = w_neck.reshape(neck_ch, backbone_ch).T.astype(bf16)
        self.b_neck = jnp.zeros((1, neck_ch), f32)

        # pts_bbox_head (one decoder layer + cls/reg branches)
        scale = 1.0 / float(D) ** 0.5
        self.queries = jax.random.normal(ks[2], (num_query, D), f32) * s
        w_cls = jax.random.normal(ks[9], (D, num_classes), f32) * s
        w_reg = jax.random.normal(ks[10], (D, code_size), f32) * s
        w_heads = jnp.zeros((D, self.HEAD_PAD), f32)
        w_heads = w_heads.at[:, :num_classes].set(w_cls)
        w_heads = w_heads.at[:, num_classes:num_classes + code_size].set(w_reg)
        self.head = {
            # attention scale folded into w_q (constant fold at setup time)
            "w_q": (jax.random.normal(ks[3], (D, D), f32) * s) * scale,
            "w_k": (jax.random.normal(ks[4], (D, D), f32) * s).astype(bf16),
            "w_v": (jax.random.normal(ks[5], (D, D), f32) * s).astype(bf16),
            "w_o": jax.random.normal(ks[6], (D, D), f32) * s,
            "w_ffn1": jax.random.normal(ks[7], (D, ffn_dim), f32) * s,
            "b_ffn1": jnp.zeros((1, ffn_dim), f32),
            "w_ffn2": jax.random.normal(ks[8], (ffn_dim, D), f32) * s,
            "b_ffn2": jnp.zeros((1, D), f32),
            "w_heads": w_heads,                    # lane-dense [cls|reg|pad]
            "b_heads": jnp.zeros((1, self.HEAD_PAD), f32),
        }
        self.backbone_ch = backbone_ch
        self.neck_ch = neck_ch
        self.num_classes = num_classes
        self.code_size = code_size

    def forward(self, img):
        # img: (B, N, C, H, W)  -- PyTorch NCHW per camera
        B, N, C, H, W = img.shape
        x = img.reshape(B * N, C, H, W)          # squeeze_/view from the module

        # ---- img_backbone + img_neck fused in one Pallas matmul kernel
        patches, OH, OW = im2col_bf16(x, 3, 3, stride=2, pad=1)
        neck = pallas_backbone_neck(patches, self.w_bb_mat, self.b_bb,
                                    self.w_neck_mat, self.b_neck,
                                    k_pad=self.k_pad)   # (BN*OH*OW, C') bf16

        # ---- view(B, BN/B, C, H', W') per level: kept logical only; the head
        # consumes the camera-flattened (B, L, D) layout directly, so no
        # NHWC<->NCHW transpose round trip is materialized.
        feats_bld = neck.reshape(B, N * OH * OW, self.neck_ch)

        # ---- pts_bbox_head: fused decoder (online-softmax over L) + heads
        out = pallas_detr3d_head(feats_bld, self.queries, self.head)
        cls = out[:, :, :self.num_classes]
        reg = out[:, :, self.num_classes:self.num_classes + self.code_size]

        return {
            "all_cls_scores": cls[None],   # (num_dec_layers=1, B, Q, num_classes)
            "all_bbox_preds": reg[None],   # (num_dec_layers=1, B, Q, code_size)
        }


if __name__ == "__main__":
    key = jax.random.PRNGKey(0)
    B, N, C, H, W = 2, 2, 3, 16, 16
    img = jax.random.normal(key, (B, N, C, H, W), jnp.float32)

    model = DETR3DExportModelPallas(seed=0)
    outs = model.forward(img)
    jax.block_until_ready(outs)

    assert outs["all_cls_scores"].shape == (1, B, 8, 10)
    assert outs["all_bbox_preds"].shape == (1, B, 8, 10)
    assert bool(jnp.all(jnp.isfinite(outs["all_cls_scores"])))
    assert bool(jnp.all(jnp.isfinite(outs["all_bbox_preds"])))
    print("KERNEL_OK")
</pallas_src>

<mosaic_0001>
module attributes {stable_mosaic.version = 11 : i64} {
  func.func @_backbone_neck_kernel(%arg0: i32, %arg1: memref<256x32xbf16, #tpu.memory_space<vmem>>, %arg2: memref<32x32xbf16, #tpu.memory_space<vmem>>, %arg3: memref<1x32xf32, #tpu.memory_space<vmem>>, %arg4: memref<32x32xbf16, #tpu.memory_space<vmem>>, %arg5: memref<1x32xf32, #tpu.memory_space<vmem>>, %arg6: memref<256x32xbf16, #tpu.memory_space<vmem>>) attributes {dimension_semantics = [#tpu.dimension_semantics<parallel>], iteration_bounds = array<i64: 1>, scalar_prefetch = 0 : i64, scratch_operands = 0 : i64, tpu.core_type = #tpu.core_type<tc>, window_params = [{transform_indices = @transform_0, window_bounds = array<i64: 256, 32>}, {pipeline_mode = #tpu.pipeline_mode<synchronous>, transform_indices = @transform_1, window_bounds = array<i64: 32, 32>}, {pipeline_mode = #tpu.pipeline_mode<synchronous>, transform_indices = @transform_2, window_bounds = array<i64: 1, 32>}, {pipeline_mode = #tpu.pipeline_mode<synchronous>, transform_indices = @transform_3, window_bounds = array<i64: 32, 32>}, {pipeline_mode = #tpu.pipeline_mode<synchronous>, transform_indices = @transform_4, window_bounds = array<i64: 1, 32>}, {transform_indices = @transform_5, window_bounds = array<i64: 256, 32>}]} {
    %c0 = arith.constant 0 : index
    %c0_0 = arith.constant 0 : index
    %0 = vector.load %arg1[%c0, %c0_0] : memref<256x32xbf16, #tpu.memory_space<vmem>>, vector<256x32xbf16>
    %c0_1 = arith.constant 0 : index
    %c0_2 = arith.constant 0 : index
    %1 = vector.load %arg2[%c0_1, %c0_2] : memref<32x32xbf16, #tpu.memory_space<vmem>>, vector<32x32xbf16>
    %cst = arith.constant dense<0.000000e+00> : vector<256x32xf32>
    %2 = tpu.matmul %0, %1, %cst {dimension_numbers = #tpu.dot_dimension_numbers<[1], [0], [0], [1], [0, 0, 1, 1], [], []>} : vector<256x32xbf16>, vector<32x32xbf16>, vector<256x32xf32> -> vector<256x32xf32>
    %c0_3 = arith.constant 0 : index
    %c0_4 = arith.constant 0 : index
    %3 = vector.load %arg3[%c0_3, %c0_4] : memref<1x32xf32, #tpu.memory_space<vmem>>, vector<1x32xf32>
    %4 = vector.broadcast %3 : vector<1x32xf32> to vector<256x32xf32>
    %5 = arith.addf %2, %4 : vector<256x32xf32>
    %cst_5 = arith.constant 0.000000e+00 : f32
    %6 = vector.broadcast %cst_5 : f32 to vector<256x32xf32>
    %7 = arith.maximumf %5, %6 : vector<256x32xf32>
    %8 = arith.truncf %7 : vector<256x32xf32> to vector<256x32xbf16>
    %c0_6 = arith.constant 0 : index
    %c0_7 = arith.constant 0 : index
    %9 = vector.load %arg4[%c0_6, %c0_7] : memref<32x32xbf16, #tpu.memory_space<vmem>>, vector<32x32xbf16>
    %cst_8 = arith.constant dense<0.000000e+00> : vector<256x32xf32>
    %10 = tpu.matmul %8, %9, %cst_8 {dimension_numbers = #tpu.dot_dimension_numbers<[1], [0], [0], [1], [0, 0, 1, 1], [], []>} : vector<256x32xbf16>, vector<32x32xbf16>, vector<256x32xf32> -> vector<256x32xf32>
    %c0_9 = arith.constant 0 : index
    %c0_10 = arith.constant 0 : index
    %11 = vector.load %arg5[%c0_9, %c0_10] : memref<1x32xf32, #tpu.memory_space<vmem>>, vector<1x32xf32>
    %12 = vector.broadcast %11 : vector<1x32xf32> to vector<256x32xf32>
    %13 = arith.addf %10, %12 : vector<256x32xf32>
    %14 = arith.truncf %13 : vector<256x32xf32> to vector<256x32xbf16>
    %c0_11 = arith.constant 0 : index
    %c0_12 = arith.constant 0 : index
    %15 = vector.load %arg6[%c0_11, %c0_12] : memref<256x32xbf16, #tpu.memory_space<vmem>>, vector<256x32xbf16>
    tpu.vector_store %arg6[%c0_11, %c0_12], %14 {strides = array<i32>} : memref<256x32xbf16, #tpu.memory_space<vmem>>, vector<256x32xbf16>,
    return
  }
  func.func @transform_0(%arg0: i32) -> (i32, i32) {
    %c0_i32 = arith.constant 0 : i32
    %c0_i32_0 = arith.constant 0 : i32
    return %arg0, %c0_i32 : i32, i32
  }
  func.func @transform_1(%arg0: i32) -> (i32, i32) {
    %c0_i32 = arith.constant 0 : i32
    %c0_i32_0 = arith.constant 0 : i32
    %c0_i32_1 = arith.constant 0 : i32
    return %c0_i32, %c0_i32_0 : i32, i32
  }
  func.func @transform_2(%arg0: i32) -> (i32, i32) {
    %c0_i32 = arith.constant 0 : i32
    %c0_i32_0 = arith.constant 0 : i32
    %c0_i32_1 = arith.constant 0 : i32
    return %c0_i32, %c0_i32_0 : i32, i32
  }
  func.func @transform_3(%arg0: i32) -> (i32, i32) {
    %c0_i32 = arith.constant 0 : i32
    %c0_i32_0 = arith.constant 0 : i32
    %c0_i32_1 = arith.constant 0 : i32
    return %c0_i32, %c0_i32_0 : i32, i32
  }
  func.func @transform_4(%arg0: i32) -> (i32, i32) {
    %c0_i32 = arith.constant 0 : i32
    %c0_i32_0 = arith.constant 0 : i32
    %c0_i32_1 = arith.constant 0 : i32
    return %c0_i32, %c0_i32_0 : i32, i32
  }
  func.func @transform_5(%arg0: i32) -> (i32, i32) {
    %c0_i32 = arith.constant 0 : i32
    %c0_i32_0 = arith.constant 0 : i32
    return %arg0, %c0_i32 : i32, i32
  }
}

</mosaic_0001>

<llo_original>
// kernel: tpu_custom_call.1
$region0: #{tpu_custom_call.1}
  #allocation0 [shape = 'u32[]', space=smem, size = 0x4, offset = 0x4, fixed_abs, tag = 'smem constant byte address 0x4 - core index']
  #allocation1 [shape = 'u32[72,128]{1,0:T(1,128)}', space=vmem, size = 0x9000, scoped, tag = 'internal scratch']
  %s0 = inlined_call_operand.vmem [shape: bf16[256,32], index: 0, kind: input, shape index: {}]
  %s1 = inlined_call_operand.vmem [shape: bf16[32,32], index: 1, kind: input, shape index: {}]
  %s2 = inlined_call_operand.vmem [shape: f32[1,32], index: 2, kind: input, shape index: {}]
  %s3 = inlined_call_operand.vmem [shape: bf16[32,32], index: 3, kind: input, shape index: {}]
  %s4 = inlined_call_operand.vmem [shape: f32[1,32], index: 4, kind: input, shape index: {}]
  %s5 = inlined_call_operand.vmem [shape: bf16[256,32], index: 5, kind: output, shape index: {}]
  %s6 = sld [smem:[#allocation0]]
  $region30: #{tpu_custom_call.1} parent=0
    _
  %s8 = ssub.s32 1, %s6
  %s9 = scalar_select 0, %s8, %s6
  // Predicated region
  $region2: #{tpu_custom_call.1} parent=0 // pred_check
    _
  $region3: #{tpu_custom_call.1} parent=0 // pred_check_branch
    %11 = sbr.rel (0) target = $region5
  $region4: #{tpu_custom_call.1} parent=0 // pred_region
    _
  $region5: #{tpu_custom_call.1} parent=0 // pred_fallthru
    _
  // Predicated region
  $region6: #{tpu_custom_call.1} parent=0 // pred_check
    _
  $region7: #{tpu_custom_call.1} parent=0 // pred_check_branch
    %13 = sbr.rel (0) target = $region9
  $region8: #{tpu_custom_call.1} parent=0 // pred_region
    _
  $region9: #{tpu_custom_call.1} parent=0 // pred_fallthru
    _
  // Predicated region
  $region10: #{tpu_custom_call.1} parent=0 // pred_check
    _
  $region11: #{tpu_custom_call.1} parent=0 // pred_check_branch
    %15 = sbr.rel (0) target = $region13
  $region12: #{tpu_custom_call.1} parent=0 // pred_region
    _
  $region13: #{tpu_custom_call.1} parent=0 // pred_fallthru
    _
  // Predicated region
  $region14: #{tpu_custom_call.1} parent=0 // pred_check
    _
  $region15: #{tpu_custom_call.1} parent=0 // pred_check_branch
    %17 = sbr.rel (0) target = $region17
  $region16: #{tpu_custom_call.1} parent=0 // pred_region
    _
  $region17: #{tpu_custom_call.1} parent=0 // pred_fallthru
    _
  // Predicated region
  $region18: #{tpu_custom_call.1} parent=0 // pred_check
    _
  $region19: #{tpu_custom_call.1} parent=0 // pred_check_branch
    %19 = sbr.rel (0) target = $region21
  $region20: #{tpu_custom_call.1} parent=0 // pred_region
    _
  $region21: #{tpu_custom_call.1} parent=0 // pred_fallthru
    _
  %v21 = vld [vmem:[%s0] sm:$0xf]
  %v22 = vld [vmem:[%s0 + $0x4] sm:$0xf]
  %v23 = vld [vmem:[%s0 + $0x8] sm:$0xf]
  %v24 = vld [vmem:[%s0 + $0xc] sm:$0xf]
  %v25 = vld [vmem:[%s0 + $0x10] sm:$0xf]
  %v26 = vld [vmem:[%s0 + $0x14] sm:$0xf]
  %v27 = vld [vmem:[%s0 + $0x18] sm:$0xf]
  %v28 = vld [vmem:[%s0 + $0x1c] sm:$0xf]
  %v29 = vld [vmem:[%s0 + $0x20] sm:$0xf]
  %v30 = vld [vmem:[%s0 + $0x24] sm:$0xf]
  %v31 = vld [vmem:[%s0 + $0x28] sm:$0xf]
  %v32 = vld [vmem:[%s0 + $0x2c] sm:$0xf]
  %v33 = vld [vmem:[%s0 + $0x30] sm:$0xf]
  %v34 = vld [vmem:[%s0 + $0x34] sm:$0xf]
  %v35 = vld [vmem:[%s0 + $0x38] sm:$0xf]
  %v36 = vld [vmem:[%s0 + $0x3c] sm:$0xf]
  %v37 = vld [vmem:[%s0 + $0x40] sm:$0xf]
  %v38 = vld [vmem:[%s0 + $0x44] sm:$0xf]
  %v39 = vld [vmem:[%s0 + $0x48] sm:$0xf]
  %v40 = vld [vmem:[%s0 + $0x4c] sm:$0xf]
  %v41 = vld [vmem:[%s0 + $0x50] sm:$0xf]
  %v42 = vld [vmem:[%s0 + $0x54] sm:$0xf]
  %v43 = vld [vmem:[%s0 + $0x58] sm:$0xf]
  %v44 = vld [vmem:[%s0 + $0x5c] sm:$0xf]
  %v45 = vld [vmem:[%s0 + $0x60] sm:$0xf]
  %v46 = vld [vmem:[%s0 + $0x64] sm:$0xf]
  %v47 = vld [vmem:[%s0 + $0x68] sm:$0xf]
  %v48 = vld [vmem:[%s0 + $0x6c] sm:$0xf]
  %v49 = vld [vmem:[%s0 + $0x70] sm:$0xf]
  %v50 = vld [vmem:[%s0 + $0x74] sm:$0xf]
  %v51 = vld [vmem:[%s0 + $0x78] sm:$0xf]
  %v52 = vld [vmem:[%s0 + $0x7c] sm:$0xf]
  %v53 = vld [vmem:[%s1] sm:$0xf]
  %v54 = vld [vmem:[%s1 + $0x4] sm:$0xf]
  %v55 = vld [vmem:[%s1 + $0x8] sm:$0xf]
  %v56 = vld [vmem:[%s1 + $0xc] sm:$0xf]
  %v57 = vld [vmem:[%s2] sm:$0x1]
  %v59 = vperm.slane %v57, 0
  %v93 = vunpack.c.l.b16 %v21
  %v94 = vunpack.c.l.b16 %v22
  %v95 = vunpack.c.l.b16 %v23
  %v96 = vunpack.c.l.b16 %v24
  %v97 = vunpack.c.l.b16 %v25
  %v98 = vunpack.c.l.b16 %v26
  %v99 = vunpack.c.l.b16 %v27
  %v100 = vunpack.c.l.b16 %v28
  %v101 = vunpack.c.l.b16 %v29
  %v102 = vunpack.c.l.b16 %v30
  %v103 = vunpack.c.l.b16 %v31
  %v104 = vunpack.c.l.b16 %v32
  %v105 = vunpack.c.l.b16 %v33
  %v106 = vunpack.c.l.b16 %v34
  %v107 = vunpack.c.l.b16 %v35
  %v108 = vunpack.c.l.b16 %v36
  %v109 = vunpack.c.l.b16 %v37
  %v110 = vunpack.c.l.b16 %v38
  %v111 = vunpack.c.l.b16 %v39
  %v112 = vunpack.c.l.b16 %v40
  %v113 = vunpack.c.l.b16 %v41
  %v114 = vunpack.c.l.b16 %v42
  %v115 = vunpack.c.l.b16 %v43
  %v116 = vunpack.c.l.b16 %v44
  %v117 = vunpack.c.l.b16 %v45
  %v118 = vunpack.c.l.b16 %v46
  %v119 = vunpack.c.l.b16 %v47
  %v120 = vunpack.c.l.b16 %v48
  %v121 = vunpack.c.l.b16 %v49
  %v122 = vunpack.c.l.b16 %v50
  %v123 = vunpack.c.l.b16 %v51
  %v124 = vunpack.c.l.b16 %v52
  %v125 = vpack.c.b16 %v94, %v93
  %v126 = vpack.c.b16 %v96, %v95
  %v127 = vpack.c.b16 %v98, %v97
  %v128 = vpack.c.b16 %v100, %v99
  %v129 = vpack.c.b16 %v102, %v101
  %v130 = vpack.c.b16 %v104, %v103
  %v131 = vpack.c.b16 %v106, %v105
  %v132 = vpack.c.b16 %v108, %v107
  %v133 = vpack.c.b16 %v110, %v109
  %v134 = vpack.c.b16 %v112, %v111
  %v135 = vpack.c.b16 %v114, %v113
  %v136 = vpack.c.b16 %v116, %v115
  %v137 = vpack.c.b16 %v118, %v117
  %v138 = vpack.c.b16 %v120, %v119
  %v139 = vpack.c.b16 %v122, %v121
  %v140 = vpack.c.b16 %v124, %v123
  %v145 = vunpack.c.l.b16 %v53
  %v146 = vunpack.c.l.b16 %v54
  %v147 = vunpack.c.l.b16 %v55
  %v148 = vunpack.c.l.b16 %v56
  %v149 = vpack.c.b16 %v146, %v145
  %v150 = vpack.c.b16 %v148, %v147
  %vm153 = vcmask 261120
  %v155 = vsel %vm153, %v125, 0
  %v158 = vsel %vm153, %v126, 0
  %v161 = vsel %vm153, %v127, 0
  %v164 = vsel %vm153, %v128, 0
  %v167 = vsel %vm153, %v129, 0
  %v170 = vsel %vm153, %v130, 0
  %v173 = vsel %vm153, %v131, 0
  %v176 = vsel %vm153, %v132, 0
  %v179 = vsel %vm153, %v133, 0
  %v182 = vsel %vm153, %v134, 0
  %v185 = vsel %vm153, %v135, 0
  %v188 = vsel %vm153, %v136, 0
  %v191 = vsel %vm153, %v137, 0
  %v194 = vsel %vm153, %v138, 0
  %v197 = vsel %vm153, %v139, 0
  %v200 = vsel %vm153, %v140, 0
  %202 = vmatpush.bf16.msra.mxu0 0
  %203 = vmatpush.bf16.msra.mxu0 0
  %204 = vmatpush.bf16.msra.mxu0 0
  %205 = vmatpush.bf16.msra.mxu0 0
  %206 = vmatpush.bf16.msra.mxu0 0
  %207 = vmatpush.bf16.msra.mxu0 0
  %208 = vmatpush.bf16.msra.mxu0 %v150
  %209 = vmatpush.bf16.msra.mxu0 %v149
  %210 = vmatmul.bf16.gmra.mxu0 %v155
  %v211 = vpop.f32.mrf.mxu0
  %v212 = vadd.f32 %v59, %v211
  %v213 = vpop.f32.mrf.mxu0
  %v214 = vadd.f32 %v59, %v213
  %215 = vmatmul.bf16.gmra.mxu0 %v158
  %v216 = vpop.f32.mrf.mxu0
  %v217 = vadd.f32 %v59, %v216
  %v218 = vpop.f32.mrf.mxu0
  %v219 = vadd.f32 %v59, %v218
  %220 = vmatmul.bf16.gmra.mxu0 %v161
  %v221 = vpop.f32.mrf.mxu0
  %v222 = vadd.f32 %v59, %v221
  %v223 = vpop.f32.mrf.mxu0
  %v224 = vadd.f32 %v59, %v223
  %225 = vmatmul.bf16.gmra.mxu0 %v164
  %v226 = vpop.f32.mrf.mxu0
  %v227 = vadd.f32 %v59, %v226
  %v228 = vpop.f32.mrf.mxu0
  %v229 = vadd.f32 %v59, %v228
  %230 = vmatmul.bf16.gmra.mxu0 %v167
  %v231 = vpop.f32.mrf.mxu0
  %v232 = vadd.f32 %v59, %v231
  %v233 = vpop.f32.mrf.mxu0
  %v234 = vadd.f32 %v59, %v233
  %235 = vmatmul.bf16.gmra.mxu0 %v170
  %v236 = vpop.f32.mrf.mxu0
  %v237 = vadd.f32 %v59, %v236
  %v238 = vpop.f32.mrf.mxu0
  %v239 = vadd.f32 %v59, %v238
  %240 = vmatmul.bf16.gmra.mxu0 %v173
  %v241 = vpop.f32.mrf.mxu0
  %v242 = vadd.f32 %v59, %v241
  %v243 = vpop.f32.mrf.mxu0
  %v244 = vadd.f32 %v59, %v243
  %245 = vmatmul.bf16.gmra.mxu0 %v176
  %v246 = vpop.f32.mrf.mxu0
  %v247 = vadd.f32 %v59, %v246
  %v248 = vpop.f32.mrf.mxu0
  %v249 = vadd.f32 %v59, %v248
  %250 = vmatmul.bf16.gmra.mxu0 %v179
  %v251 = vpop.f32.mrf.mxu0
  %v252 = vadd.f32 %v59, %v251
  %v253 = vpop.f32.mrf.mxu0
  %v254 = vadd.f32 %v59, %v253
  %255 = vmatmul.bf16.gmra.mxu0 %v182
  %v256 = vpop.f32.mrf.mxu0
  %v257 = vadd.f32 %v59, %v256
  %v258 = vpop.f32.mrf.mxu0
  %v259 = vadd.f32 %v59, %v258
  %260 = vmatmul.bf16.gmra.mxu0 %v185
  %v261 = vpop.f32.mrf.mxu0
  %v262 = vadd.f32 %v59, %v261
  %v263 = vpop.f32.mrf.mxu0
  %v264 = vadd.f32 %v59, %v263
  %265 = vmatmul.bf16.gmra.mxu0 %v188
  %v266 = vpop.f32.mrf.mxu0
  %v267 = vadd.f32 %v59, %v266
  %v268 = vpop.f32.mrf.mxu0
  %v269 = vadd.f32 %v59, %v268
  %270 = vmatmul.bf16.gmra.mxu0 %v191
  %v271 = vpop.f32.mrf.mxu0
  %v272 = vadd.f32 %v59, %v271
  %v273 = vpop.f32.mrf.mxu0
  %v274 = vadd.f32 %v59, %v273
  %275 = vmatmul.bf16.gmra.mxu0 %v194
  %v276 = vpop.f32.mrf.mxu0
  %v277 = vadd.f32 %v59, %v276
  %v278 = vpop.f32.mrf.mxu0
  %v279 = vadd.f32 %v59, %v278
  %280 = vmatmul.bf16.gmra.mxu0 %v197
  %v281 = vpop.f32.mrf.mxu0
  %v282 = vadd.f32 %v59, %v281
  %v283 = vpop.f32.mrf.mxu0
  %v284 = vadd.f32 %v59, %v283
  %285 = vmatmul.bf16.gmra.mxu0 %v200
  %v286 = vpop.f32.mrf.mxu0
  %v287 = vadd.f32 %v59, %v286
  %v288 = vpop.f32.mrf.mxu0
  %v289 = vadd.f32 %v59, %v288
  %290 = vdwg.mxu0
  %v291 = vmax.f32 %v212, 0.0
  %v292 = vmax.f32 %v214, 0.0
  %v293 = vmax.f32 %v217, 0.0
  %v294 = vmax.f32 %v219, 0.0
  %v295 = vmax.f32 %v222, 0.0
  %v296 = vmax.f32 %v224, 0.0
  %v297 = vmax.f32 %v227, 0.0
  %v298 = vmax.f32 %v229, 0.0
  %v299 = vmax.f32 %v232, 0.0
  %v300 = vmax.f32 %v234, 0.0
  %v301 = vmax.f32 %v237, 0.0
  %v302 = vmax.f32 %v239, 0.0
  %v303 = vmax.f32 %v242, 0.0
  %v304 = vmax.f32 %v244, 0.0
  %v305 = vmax.f32 %v247, 0.0
  %v306 = vmax.f32 %v249, 0.0
  %v307 = vmax.f32 %v252, 0.0
  %v308 = vmax.f32 %v254, 0.0
  %v309 = vmax.f32 %v257, 0.0
  %v310 = vmax.f32 %v259, 0.0
  %v311 = vmax.f32 %v262, 0.0
  %v312 = vmax.f32 %v264, 0.0
  %v313 = vmax.f32 %v267, 0.0
  %v314 = vmax.f32 %v269, 0.0
  %v315 = vmax.f32 %v272, 0.0
  %v316 = vmax.f32 %v274, 0.0
  %v317 = vmax.f32 %v277, 0.0
  %v318 = vmax.f32 %v279, 0.0
  %v319 = vmax.f32 %v282, 0.0
  %v320 = vmax.f32 %v284, 0.0
  %v321 = vmax.f32 %v287, 0.0
  %v322 = vmax.f32 %v289, 0.0
  %v323 = vpack.c.bf16 %v292, %v291
  %v324 = vpack.c.bf16 %v294, %v293
  %v325 = vpack.c.bf16 %v296, %v295
  %v326 = vpack.c.bf16 %v298, %v297
  %v327 = vpack.c.bf16 %v300, %v299
  %v328 = vpack.c.bf16 %v302, %v301
  %v329 = vpack.c.bf16 %v304, %v303
  %v330 = vpack.c.bf16 %v306, %v305
  %v331 = vpack.c.bf16 %v308, %v307
  %v332 = vpack.c.bf16 %v310, %v309
  %v333 = vpack.c.bf16 %v312, %v311
  %v334 = vpack.c.bf16 %v314, %v313
  %v335 = vpack.c.bf16 %v316, %v315
  %v336 = vpack.c.bf16 %v318, %v317
  %v337 = vpack.c.bf16 %v320, %v319
  %v338 = vpack.c.bf16 %v322, %v321
  %v339 = vld [vmem:[%s3] sm:$0xf]
  %v340 = vld [vmem:[%s3 + $0x4] sm:$0xf]
  %v341 = vld [vmem:[%s3 + $0x8] sm:$0xf]
  %v342 = vld [vmem:[%s3 + $0xc] sm:$0xf]
  %v343 = vld [vmem:[%s4] sm:$0x1]
  %v345 = vperm.slane %v343, 0
  %v351 = vunpack.c.l.b16 %v339
  %v352 = vunpack.c.l.b16 %v340
  %v353 = vunpack.c.l.b16 %v341
  %v354 = vunpack.c.l.b16 %v342
  %v355 = vpack.c.b16 %v352, %v351
  %v356 = vpack.c.b16 %v354, %v353
  %v360 = vsel %vm153, %v323, 0
  %v363 = vsel %vm153, %v324, 0
  %v366 = vsel %vm153, %v325, 0
  %v369 = vsel %vm153, %v326, 0
  %v372 = vsel %vm153, %v327, 0
  %v375 = vsel %vm153, %v328, 0
  %v378 = vsel %vm153, %v329, 0
  %v381 = vsel %vm153, %v330, 0
  %v384 = vsel %vm153, %v331, 0
  %v387 = vsel %vm153, %v332, 0
  %v390 = vsel %vm153, %v333, 0
  %v393 = vsel %vm153, %v334, 0
  %v396 = vsel %vm153, %v335, 0
  %v399 = vsel %vm153, %v336, 0
  %v402 = vsel %vm153, %v337, 0
  %v405 = vsel %vm153, %v338, 0
  %407 = vmatpush.bf16.msra.mxu0 0
  %408 = vmatpush.bf16.msra.mxu0 0
  %409 = vmatpush.bf16.msra.mxu0 0
  %410 = vmatpush.bf16.msra.mxu0 0
  %411 = vmatpush.bf16.msra.mxu0 0
  %412 = vmatpush.bf16.msra.mxu0 0
  %413 = vmatpush.bf16.msra.mxu0 %v356
  %414 = vmatpush.bf16.msra.mxu0 %v355
  %415 = vmatmul.bf16.gmra.mxu0 %v360
  %v416 = vpop.f32.mrf.mxu0
  %v417 = vadd.f32 %v345, %v416
  %v418 = vpop.f32.mrf.mxu0
  %v419 = vadd.f32 %v345, %v418
  %420 = vmatmul.bf16.gmra.mxu0 %v363
  %v421 = vpop.f32.mrf.mxu0
  %v422 = vadd.f32 %v345, %v421
  %v423 = vpop.f32.mrf.mxu0
  %v424 = vadd.f32 %v345, %v423
  %425 = vmatmul.bf16.gmra.mxu0 %v366
  %v426 = vpop.f32.mrf.mxu0
  %v427 = vadd.f32 %v345, %v426
  %v428 = vpop.f32.mrf.mxu0
  %v429 = vadd.f32 %v345, %v428
  %430 = vmatmul.bf16.gmra.mxu0 %v369
  %v431 = vpop.f32.mrf.mxu0
  %v432 = vadd.f32 %v345, %v431
  %v433 = vpop.f32.mrf.mxu0
  %v434 = vadd.f32 %v345, %v433
  %435 = vmatmul.bf16.gmra.mxu0 %v372
  %v436 = vpop.f32.mrf.mxu0
  %v437 = vadd.f32 %v345, %v436
  %v438 = vpop.f32.mrf.mxu0
  %v439 = vadd.f32 %v345, %v438
  %440 = vmatmul.bf16.gmra.mxu0 %v375
  %v441 = vpop.f32.mrf.mxu0
  %v442 = vadd.f32 %v345, %v441
  %v443 = vpop.f32.mrf.mxu0
  %v444 = vadd.f32 %v345, %v443
  %445 = vmatmul.bf16.gmra.mxu0 %v378
  %v446 = vpop.f32.mrf.mxu0
  %v447 = vadd.f32 %v345, %v446
  %v448 = vpop.f32.mrf.mxu0
  %v449 = vadd.f32 %v345, %v448
  %450 = vmatmul.bf16.gmra.mxu0 %v381
  %v451 = vpop.f32.mrf.mxu0
  %v452 = vadd.f32 %v345, %v451
  %v453 = vpop.f32.mrf.mxu0
  %v454 = vadd.f32 %v345, %v453
  %455 = vmatmul.bf16.gmra.mxu0 %v384
  %v456 = vpop.f32.mrf.mxu0
  %v457 = vadd.f32 %v345, %v456
  %v458 = vpop.f32.mrf.mxu0
  %v459 = vadd.f32 %v345, %v458
  %460 = vmatmul.bf16.gmra.mxu0 %v387
  %v461 = vpop.f32.mrf.mxu0
  %v462 = vadd.f32 %v345, %v461
  %v463 = vpop.f32.mrf.mxu0
  %v464 = vadd.f32 %v345, %v463
  %465 = vmatmul.bf16.gmra.mxu0 %v390
  %v466 = vpop.f32.mrf.mxu0
  %v467 = vadd.f32 %v345, %v466
  %v468 = vpop.f32.mrf.mxu0
  %v469 = vadd.f32 %v345, %v468
  %470 = vmatmul.bf16.gmra.mxu0 %v393
  %v471 = vpop.f32.mrf.mxu0
  %v472 = vadd.f32 %v345, %v471
  %v473 = vpop.f32.mrf.mxu0
  %v474 = vadd.f32 %v345, %v473
  %475 = vmatmul.bf16.gmra.mxu0 %v396
  %v476 = vpop.f32.mrf.mxu0
  %v477 = vadd.f32 %v345, %v476
  %v478 = vpop.f32.mrf.mxu0
  %v479 = vadd.f32 %v345, %v478
  %480 = vmatmul.bf16.gmra.mxu0 %v399
  %v481 = vpop.f32.mrf.mxu0
  %v482 = vadd.f32 %v345, %v481
  %v483 = vpop.f32.mrf.mxu0
  %v484 = vadd.f32 %v345, %v483
  %485 = vmatmul.bf16.gmra.mxu0 %v402
  %v486 = vpop.f32.mrf.mxu0
  %v487 = vadd.f32 %v345, %v486
  %v488 = vpop.f32.mrf.mxu0
  %v489 = vadd.f32 %v345, %v488
  %490 = vmatmul.bf16.gmra.mxu0 %v405
  %v491 = vpop.f32.mrf.mxu0
  %v492 = vadd.f32 %v345, %v491
  %v493 = vpop.f32.mrf.mxu0
  %v494 = vadd.f32 %v345, %v493
  %495 = vdwg.mxu0
  %v496 = vpack.c.bf16 %v417, %v417
  %v497 = vpack.c.bf16 %v419, %v419
  %v498 = vpack.c.bf16 %v422, %v422
  %v499 = vpack.c.bf16 %v424, %v424
  %v500 = vpack.c.bf16 %v427, %v427
  %v501 = vpack.c.bf16 %v429, %v429
  %v502 = vpack.c.bf16 %v432, %v432
  %v503 = vpack.c.bf16 %v434, %v434
  %v504 = vpack.c.bf16 %v437, %v437
  %v505 = vpack.c.bf16 %v439, %v439
  %v506 = vpack.c.bf16 %v442, %v442
  %v507 = vpack.c.bf16 %v444, %v444
  %v508 = vpack.c.bf16 %v447, %v447
  %v509 = vpack.c.bf16 %v449, %v449
  %v510 = vpack.c.bf16 %v452, %v452
  %v511 = vpack.c.bf16 %v454, %v454
  %v512 = vpack.c.bf16 %v457, %v457
  %v513 = vpack.c.bf16 %v459, %v459
  %v514 = vpack.c.bf16 %v462, %v462
  %v515 = vpack.c.bf16 %v464, %v464
  %v516 = vpack.c.bf16 %v467, %v467
  %v517 = vpack.c.bf16 %v469, %v469
  %v518 = vpack.c.bf16 %v472, %v472
  %v519 = vpack.c.bf16 %v474, %v474
  %v520 = vpack.c.bf16 %v477, %v477
  %v521 = vpack.c.bf16 %v479, %v479
  %v522 = vpack.c.bf16 %v482, %v482
  %v523 = vpack.c.bf16 %v484, %v484
  %v524 = vpack.c.bf16 %v487, %v487
  %v525 = vpack.c.bf16 %v489, %v489
  %v526 = vpack.c.bf16 %v492, %v492
  %v527 = vpack.c.bf16 %v494, %v494
  %vm528 = vcmask 257024
  %529 = vst.msk [vmem:[%s5] sm:$0xf] %vm528, %v496
  %530 = vst.msk [vmem:[%s5 + $0x4] sm:$0xf] %vm528, %v497
  %531 = vst.msk [vmem:[%s5 + $0x8] sm:$0xf] %vm528, %v498
  %532 = vst.msk [vmem:[%s5 + $0xc] sm:$0xf] %vm528, %v499
  %533 = vst.msk [vmem:[%s5 + $0x10] sm:$0xf] %vm528, %v500
  %534 = vst.msk [vmem:[%s5 + $0x14] sm:$0xf] %vm528, %v501
  %535 = vst.msk [vmem:[%s5 + $0x18] sm:$0xf] %vm528, %v502
  %536 = vst.msk [vmem:[%s5 + $0x1c] sm:$0xf] %vm528, %v503
  %537 = vst.msk [vmem:[%s5 + $0x20] sm:$0xf] %vm528, %v504
  %538 = vst.msk [vmem:[%s5 + $0x24] sm:$0xf] %vm528, %v505
  %539 = vst.msk [vmem:[%s5 + $0x28] sm:$0xf] %vm528, %v506
  %540 = vst.msk [vmem:[%s5 + $0x2c] sm:$0xf] %vm528, %v507
  %541 = vst.msk [vmem:[%s5 + $0x30] sm:$0xf] %vm528, %v508
  %542 = vst.msk [vmem:[%s5 + $0x34] sm:$0xf] %vm528, %v509
  %543 = vst.msk [vmem:[%s5 + $0x38] sm:$0xf] %vm528, %v510
  %544 = vst.msk [vmem:[%s5 + $0x3c] sm:$0xf] %vm528, %v511
  %545 = vst.msk [vmem:[%s5 + $0x40] sm:$0xf] %vm528, %v512
  %546 = vst.msk [vmem:[%s5 + $0x44] sm:$0xf] %vm528, %v513
  %547 = vst.msk [vmem:[%s5 + $0x48] sm:$0xf] %vm528, %v514
  %548 = vst.msk [vmem:[%s5 + $0x4c] sm:$0xf] %vm528, %v515
  %549 = vst.msk [vmem:[%s5 + $0x50] sm:$0xf] %vm528, %v516
  %550 = vst.msk [vmem:[%s5 + $0x54] sm:$0xf] %vm528, %v517
  %551 = vst.msk [vmem:[%s5 + $0x58] sm:$0xf] %vm528, %v518
  %552 = vst.msk [vmem:[%s5 + $0x5c] sm:$0xf] %vm528, %v519
  %553 = vst.msk [vmem:[%s5 + $0x60] sm:$0xf] %vm528, %v520
  %554 = vst.msk [vmem:[%s5 + $0x64] sm:$0xf] %vm528, %v521
  %555 = vst.msk [vmem:[%s5 + $0x68] sm:$0xf] %vm528, %v522
  %556 = vst.msk [vmem:[%s5 + $0x6c] sm:$0xf] %vm528, %v523
  %557 = vst.msk [vmem:[%s5 + $0x70] sm:$0xf] %vm528, %v524
  %558 = vst.msk [vmem:[%s5 + $0x74] sm:$0xf] %vm528, %v525
  %559 = vst.msk [vmem:[%s5 + $0x78] sm:$0xf] %vm528, %v526
  %560 = vst.msk [vmem:[%s5 + $0x7c] sm:$0xf] %vm528, %v527
  // Predicated region
  $region22: #{tpu_custom_call.1} parent=0 // pred_check
    _
  $region23: #{tpu_custom_call.1} parent=0 // pred_check_branch
    %562 = sbr.rel (0) target = $region25
  $region24: #{tpu_custom_call.1} parent=0 // pred_region
    _
  $region25: #{tpu_custom_call.1} parent=0 // pred_fallthru
    _
  // Predicated region
  $region26: #{tpu_custom_call.1} parent=0 // pred_check
    _
  $region27: #{tpu_custom_call.1} parent=0 // pred_check_branch
    %564 = sbr.rel (0) target = $region29
  $region28: #{tpu_custom_call.1} parent=0 // pred_region
    _
  $region29: #{tpu_custom_call.1} parent=0 // pred_fallthru
    _

</llo_original>
